<compile_context>
chip_gen: v7x
topology: tpu7x:2x2x1
jax: 0.10.0
libtpu: 0.0.40
codegen_flags: <defaults>
</compile_context>

<pallas_src>
import functools
import math

import jax
import jax.numpy as jnp
from jax.experimental import pallas as pl
from jax.experimental.pallas import tpu as pltpu


# ---------------------------------------------------------------------------
# Buffer construction — identical to the PyTorch __init__ (float32, (L, 1, D)).
# ---------------------------------------------------------------------------
def make_positional_encoding(d_model, max_seq_length=5000):
    position = jnp.arange(max_seq_length, dtype=jnp.float32)[:, None]           # (L, 1)
    div_term = jnp.exp(
        jnp.arange(0, d_model, 2, dtype=jnp.float32) * (-math.log(10000.0) / d_model)
    )                                                                            # (D/2,)
    angles = position * div_term                                                 # (L, D/2)
    pe = jnp.zeros((max_seq_length, d_model), jnp.float32)
    pe = pe.at[:, 0::2].set(jnp.sin(angles))
    pe = pe.at[:, 1::2].set(jnp.cos(angles))
    # torch: pe.unsqueeze(0).transpose(0, 1) -> (L, 1, D)
    return pe[:, None, :]


# ---------------------------------------------------------------------------
# Kernels
# ---------------------------------------------------------------------------
def _add_pe_kernel_3d(x_ref, pe_ref, o_ref):
    # x_ref/o_ref: (T, B, D); pe_ref: (T, D). Broadcast pe over the batch axis.
    o_ref[...] = (x_ref[...] + pe_ref[...][:, None, :]).astype(o_ref.dtype)


def _add_pe_kernel_2d(x_ref, pe_ref, o_ref, *, batch):
    # x_ref/o_ref: (T, B*D) lane-folded; pe_ref: (T, D).
    # Replicate pe B times along lanes (matches the (b, d) -> b*D + d folding).
    pe_t = pe_ref[...]
    pe_wide = jnp.concatenate([pe_t] * batch, axis=-1) if batch > 1 else pe_t
    o_ref[...] = (x_ref[...] + pe_wide).astype(o_ref.dtype)


# ---------------------------------------------------------------------------
# Hardware-aware helpers
# ---------------------------------------------------------------------------
def _vmem_capacity_bytes():
    try:
        info = pltpu.get_tpu_info()
        cap = getattr(info, "vmem_capacity_bytes", None)
        if cap:
            return int(cap)
    except Exception:
        pass
    return 64 * 1024 * 1024   # conservative fallback (v7x per-TensorCore VMEM)


def _is_v7x():
    try:
        kind = jax.devices()[0].device_kind.lower()
        return any(tag in kind for tag in ("v7", "7x"))
    except Exception:
        return False


def _default_vmem_limit_bytes():
    cap = _vmem_capacity_bytes()
    # ~3/4 of physical VMEM, capped at 96 MiB.
    #   v5e/v6e (128 MiB physical) -> 96 MiB scoped; v7x (64 MiB/TC) -> 48 MiB.
    return min((cap // 4) * 3, 96 * 1024 * 1024)


def _pick_seq_tile(S, row_x, row_o, row_pe, *, vmem_budget_bytes,
                   target_block_bytes=8 * 1024 * 1024, v7x_megacore=False):
    """Sequence rows per grid step.

    row_x / row_o / row_pe: VMEM bytes per sequence row for the x-in, out and
    pe blocks (lane/sublane-padded). Budget counts double buffering (x2).
    """
    per_row = 2 * (row_x + row_o + row_pe)
    t_budget = vmem_budget_bytes // max(1, per_row)
    t_target = target_block_bytes // max(1, row_x)
    t = max(8, min(t_budget, t_target))
    if v7x_megacore and S >= 32:
        # Megacore sharding needs >=2 grid steps; keep >=4 (>=2 per core) so
        # each core can still double-buffer. Never force a split on v5e/v6e.
        t = min(t, -(-S // 4))
    t = max(8, (t // 8) * 8)
    t = min(t, S)
    # Prefer a multiple-of-8 divisor of S (avoids the ragged epilogue block).
    if t < S and S % t != 0:
        for cand in range(t, max(8, t // 2) - 1, -8):
            if S % cand == 0:
                t = cand
                break
    return max(1, min(t, S))


# ---------------------------------------------------------------------------
# Forward
# ---------------------------------------------------------------------------
def positional_encoding_forward(x, pe, *, seq_tile=None, out_dtype=None,
                                donate_x=False, vmem_limit_bytes=None):
    """x: (S, B, D); pe: (L, 1, D) or (L, D) with L >= S. Returns x + pe[:S].

    out_dtype defaults to promote_types(x.dtype, pe.dtype) (PyTorch semantics).
    donate_x=True aliases x's HBM buffer for the output (caller must not reuse x).
    """
    S, B, D = x.shape
    pe2d = pe.reshape(pe.shape[0], pe.shape[-1]) if pe.ndim == 3 else pe
    L, Dp = pe2d.shape
    assert Dp == D, f"pe d_model {Dp} != x d_model {D}"
    assert S <= L, f"sequence length {S} exceeds max_seq_length {L}"

    if out_dtype is None:
        out_dtype = jnp.promote_types(x.dtype, pe2d.dtype)
    x_item = jnp.dtype(x.dtype).itemsize
    o_item = jnp.dtype(out_dtype).itemsize
    pe_item = jnp.dtype(pe2d.dtype).itemsize

    if vmem_limit_bytes is None:
        vmem_limit_bytes = _default_vmem_limit_bytes()

    # Lane-dense layout choice: keep the natural 3-D layout only when both the
    # batch (sublane) and d_model (lane) axes are already dense; otherwise fold
    # (B, D) into a single lane axis.
    fold = not (B >= 8 and D % 128 == 0)

    # Per-sequence-row VMEM bytes (padded to the (8, 128) vreg tiling).
    pe_lane_pad = -(-D // 128) * 128
    if fold:
        lane_pad = -(-(B * D) // 128) * 128
        row_x, row_o = lane_pad * x_item, lane_pad * o_item
    else:
        sub_pad = -(-B // 8) * 8
        lane_pad = -(-D // 128) * 128
        row_x = sub_pad * lane_pad * x_item
        row_o = sub_pad * lane_pad * o_item
    row_pe = pe_lane_pad * pe_item

    if seq_tile is None:
        seq_tile = _pick_seq_tile(
            S, row_x, row_o, row_pe,
            vmem_budget_bytes=max(8 << 20, vmem_limit_bytes - (4 << 20)),
            target_block_bytes=8 << 20,
            v7x_megacore=_is_v7x(),
        )
    # Sanitize: a block smaller than the full array must be a multiple of 8.
    seq_tile = max(1, min(int(seq_tile), S))
    if seq_tile < S and seq_tile % 8 != 0:
        seq_tile = min(S, max(8, (seq_tile // 8) * 8))

    # If seq_tile is not a multiple of 8 (only when seq_tile == S < next mult
    # of 8), slice pe to (S, D) so the pe block equals the full array extent.
    pe_arg = pe2d[:S] if (seq_tile % 8 != 0) else pe2d

    grid = (pl.cdiv(S, seq_tile),)

    if fold:
        x_in = x.reshape(S, B * D)                      # free: row-major collapse
        kernel = functools.partial(_add_pe_kernel_2d, batch=B)
        x_spec = pl.BlockSpec((seq_tile, B * D), lambda i: (i, 0))
        o_spec = pl.BlockSpec((seq_tile, B * D), lambda i: (i, 0))
        out_shape = jax.ShapeDtypeStruct((S, B * D), out_dtype)
    else:
        x_in = x
        kernel = _add_pe_kernel_3d
        x_spec = pl.BlockSpec((seq_tile, B, D), lambda i: (i, 0, 0))
        o_spec = pl.BlockSpec((seq_tile, B, D), lambda i: (i, 0, 0))
        out_shape = jax.ShapeDtypeStruct((S, B, D), out_dtype)
    pe_spec = pl.BlockSpec((seq_tile, D), lambda i: (i, 0))

    call_kwargs = {}
    if donate_x and out_dtype == x.dtype:
        # Reuse x's HBM buffer for the output (caller must not reuse x).
        call_kwargs["input_output_aliases"] = {0: 0}

    out = pl.pallas_call(
        kernel,
        out_shape=out_shape,
        grid_spec=pltpu.PrefetchScalarGridSpec(
            num_scalar_prefetch=0,
            grid=grid,
            in_specs=[x_spec, pe_spec],
            out_specs=o_spec,
        ),
        compiler_params=pltpu.CompilerParams(
            dimension_semantics=("parallel",),
            vmem_limit_bytes=int(vmem_limit_bytes),
        ),
        cost_estimate=pl.CostEstimate(
            flops=S * B * D,
            transcendentals=0,
            bytes_accessed=S * B * D * (x_item + o_item) + S * D * pe_item,
        ),
        **call_kwargs,
    )(x_in, pe_arg)

    return out.reshape(S, B, D) if fold else out


if __name__ == "__main__":
    d_model = 32
    seq_len = 8
    batch = 2
    max_seq_length = 5000

    key = jax.random.PRNGKey(0)
    x = jax.random.normal(key, (seq_len, batch, d_model), dtype=jnp.float32)

    pe = make_positional_encoding(d_model, max_seq_length)

    out = positional_encoding_forward(x, pe)
    out = jax.block_until_ready(out)

    # reference (pure JAX) check, matching the PyTorch forward
    ref = x + pe[:seq_len]
    assert out.shape == x.shape
    assert out.dtype == ref.dtype
    assert jnp.allclose(out, ref, atol=1e-6, rtol=1e-6)

    print("KERNEL_OK")
</pallas_src>

<mosaic_0001>
module attributes {stable_mosaic.version = 11 : i64} {
  func.func @_add_pe_kernel_2d(%arg0: i32, %arg1: memref<8x64xf32, #tpu.memory_space<vmem>>, %arg2: memref<8x32xf32, #tpu.memory_space<vmem>>, %arg3: memref<8x64xf32, #tpu.memory_space<vmem>>) attributes {dimension_semantics = [#tpu.dimension_semantics<parallel>], iteration_bounds = array<i64: 1>, scalar_prefetch = 0 : i64, scratch_operands = 0 : i64, tpu.core_type = #tpu.core_type<tc>, window_params = [{transform_indices = @transform_0, window_bounds = array<i64: 8, 64>}, {transform_indices = @transform_1, window_bounds = array<i64: 8, 32>}, {transform_indices = @transform_2, window_bounds = array<i64: 8, 64>}]} {
    %c0 = arith.constant 0 : index
    %c0_0 = arith.constant 0 : index
    %0 = vector.load %arg2[%c0, %c0_0] : memref<8x32xf32, #tpu.memory_space<vmem>>, vector<8x32xf32>
    %1 = tpu.concatenate %0, %0 in 1 : vector<8x32xf32>, vector<8x32xf32> -> vector<8x64xf32>
    %c0_1 = arith.constant 0 : index
    %c0_2 = arith.constant 0 : index
    %2 = vector.load %arg1[%c0_1, %c0_2] : memref<8x64xf32, #tpu.memory_space<vmem>>, vector<8x64xf32>
    %3 = arith.addf %2, %1 : vector<8x64xf32>
    %c0_3 = arith.constant 0 : index
    %c0_4 = arith.constant 0 : index
    %4 = vector.load %arg3[%c0_3, %c0_4] : memref<8x64xf32, #tpu.memory_space<vmem>>, vector<8x64xf32>
    tpu.vector_store %arg3[%c0_3, %c0_4], %3 {strides = array<i32>} : memref<8x64xf32, #tpu.memory_space<vmem>>, vector<8x64xf32>,
    return
  }
  func.func @transform_0(%arg0: i32) -> (i32, i32) {
    %c0_i32 = arith.constant 0 : i32
    %c0_i32_0 = arith.constant 0 : i32
    return %arg0, %c0_i32 : i32, i32
  }
  func.func @transform_1(%arg0: i32) -> (i32, i32) {
    %c0_i32 = arith.constant 0 : i32
    %c0_i32_0 = arith.constant 0 : i32
    return %arg0, %c0_i32 : i32, i32
  }
  func.func @transform_2(%arg0: i32) -> (i32, i32) {
    %c0_i32 = arith.constant 0 : i32
    %c0_i32_0 = arith.constant 0 : i32
    return %arg0, %c0_i32 : i32, i32
  }
}

</mosaic_0001>

<llo_original>
// kernel: tpu_custom_call.1
$region0: #{tpu_custom_call.1}
  #allocation0 [shape = 'u32[]', space=smem, size = 0x4, offset = 0x4, fixed_abs, tag = 'smem constant byte address 0x4 - core index']
  #allocation1 [shape = 'u32[144,128]{1,0:T(1,128)}', space=vmem, size = 0x12000, scoped, tag = 'internal scratch']
  %s0 = inlined_call_operand.vmem [shape: f32[8,64], index: 0, kind: input, shape index: {}]
  %s1 = inlined_call_operand.vmem [shape: f32[5000,32], index: 1, kind: input, shape index: {}]
  %s2 = inlined_call_operand.hbm [shape: f32[8,64], index: 2, kind: output, shape index: {}]
  %s3 = sld [smem:[#allocation0]]
  $region18: #{tpu_custom_call.1} parent=0
    _
  %s5 = ssub.s32 1, %s3
  %s6 = scalar_select 0, %s5, %s3
  $region1: #{tpu_custom_call.1} parent=0
    #allocation2 [shape = 'u8[4096]{0}', space=vmem, size = 0x1000, scoped, tag = 'output window, operand 0, single buffered']
    #allocation3 [shape = 's32[1]{0}', space=sflag, size = 0x4, scoped, tag = 'scoped memory for tpu_custom_call.1']
    %7 = vsyncpa [#allocation3], 0
    // Predicated region
    $region2: #{tpu_custom_call.1} parent=1 // pred_check
      _
    $region3: #{tpu_custom_call.1} parent=1 // pred_check_branch
      %9 = sbr.rel (0) target = $region5
    $region4: #{tpu_custom_call.1} parent=1 // pred_region
      _
    $region5: #{tpu_custom_call.1} parent=1 // pred_fallthru
      _
    // Predicated region
    $region6: #{tpu_custom_call.1} parent=1 // pred_check
      _
    $region7: #{tpu_custom_call.1} parent=1 // pred_check_branch
      %11 = sbr.rel (0) target = $region9
    $region8: #{tpu_custom_call.1} parent=1 // pred_region
      _
    $region9: #{tpu_custom_call.1} parent=1 // pred_fallthru
      _
    %v12 = vld [vmem:[%s1] sm:$0xff]
    %14 = vrot.lane.b32.xlu0 %v12, 32
    %v15 = vpop.permute.xlu0 %14
    %vm17 = vcmask 261120
    %v18 = vsel %vm17, %v12, %v15
    %v19 = vld [vmem:[%s0] sm:$0xff]
    %v20 = vadd.f32 %v19, %v18
    %vm21 = vcmask 523264
    %22 = vst.msk [vmem:[#allocation2] sm:$0xff] %vm21, %v20
    // Predicated region
    $region10: #{tpu_custom_call.1} parent=1 // pred_check
      _
    $region11: #{tpu_custom_call.1} parent=1 // pred_check_branch
      %24 = sbr.rel (0) target = $region13
    $region12: #{tpu_custom_call.1} parent=1 // pred_region
      %s26 = ssub.s32 128, 128
      %27 = vsyncadd [#allocation3], %s26
      %s29 = sshll.u32 [#allocation2], 4
      %s30 = int_to_ptr.vmem [resolvable:$true] %s29
      %32 = dma.vmem_to_hbm [thread:$0]  %s30, 128, %s2, [#allocation3]
    $region13: #{tpu_custom_call.1} parent=1 // pred_fallthru
      _
    // Predicated region
    $region14: #{tpu_custom_call.1} parent=1 // pred_check
      _
    $region15: #{tpu_custom_call.1} parent=1 // pred_check_branch
      %34 = sbr.rel (0) target = $region17
    $region16: #{tpu_custom_call.1} parent=1 // pred_region
      %35 = dma.done [#allocation3], 128
    $region17: #{tpu_custom_call.1} parent=1 // pred_fallthru
      _
    %36 = vsyncpa [#allocation3], 1

</llo_original>
